<compile_context>
chip_gen: v5e
topology: v5e:2x2
jax: 0.10.0
libtpu: 0.0.40
codegen_flags: <defaults>
</compile_context>

<pallas_src>
import functools

import jax
import jax.numpy as jnp
from jax.experimental import pallas as pl
from jax.experimental.pallas import tpu as pltpu

LANE = 128


def _round_up(n, m):
    return (n + m - 1) // m * m


# --------------------------------------------------------------------------- kernel
def _vae_kernel(latent_dim,
                in_ref,
                w1_ref, b1_ref,
                wml_ref, bml_ref,
                w2_ref, b2_ref,
                w3_ref, b3_ref,
                out_ref):
    f32, bf16 = jnp.float32, jnp.bfloat16

    slab = in_ref[...]                         # (Bt, 128) bf16 packed input
    slab_f32 = slab.astype(f32)

    # ---- encode: fc1 over the packed slab (only the x|c rows of w1 are non-zero) + ReLU
    h = jnp.dot(slab, w1_ref[...], preferred_element_type=f32) + b1_ref[...]
    h = jnp.maximum(h, 0.0)                    # (Bt, Hp)

    # ---- fused mu|logvar projection: lanes [0:L)=mu, [L:2L)=logvar, rest exactly 0
    mulv = jnp.dot(h.astype(bf16), wml_ref[...], preferred_element_type=f32) + bml_ref[...]

    # ---- reparameterize + assemble decoder input cat([z, c]) fully in-lane:
    #   lanes [0:L)     : mu
    #   lanes [L:2L)    : eps * exp(0.5*logvar)      (eps lives in those slab lanes)
    #   lanes [2L:2L+C) : c  (mulv==0 there -> exp(0)=1 passes c through exactly)
    #   other lanes carry leftover x|c values, but the packed fc2 weight rows there
    #   are zero, so they contribute nothing.  No roll, no masks, no tiny-K matmuls.
    lane = jax.lax.broadcasted_iota(jnp.int32, mulv.shape, 1)
    zc = jnp.where(lane < latent_dim, mulv, 0.0) + slab_f32 * jnp.exp(0.5 * mulv)

    # ---- decode: fc2 + ReLU, then fc3 (no sigmoid).  fc3 columns are pre-shifted to
    #      lanes [2L:2L+Din), so the fused output slab is a single lane-dense store:
    #      lanes [0:2L) = mu|logvar, lanes [2L:2L+Din) = x_recon, rest = 0.
    d = jnp.dot(zc.astype(bf16), w2_ref[...], preferred_element_type=f32) + b2_ref[...]
    d = jnp.maximum(d, 0.0)                    # (Bt, Hp)
    xrec = jnp.dot(d.astype(bf16), w3_ref[...], preferred_element_type=f32) + b3_ref[...]
    out_ref[...] = mulv + xrec                 # disjoint lane ranges -> exact fusion


# --------------------------------------------------------------------------- params
def init_params(key, input_dim, condition_dim, hidden_dim, latent_dim):
    """PyTorch-equivalent parameters; Linear weights stored transposed as (in, out)."""
    def linear(k, fan_in, fan_out):
        kw, kb = jax.random.split(k)
        bound = float(fan_in) ** -0.5
        w = jax.random.uniform(kw, (fan_in, fan_out), jnp.float32, -bound, bound)
        b = jax.random.uniform(kb, (fan_out,), jnp.float32, -bound, bound)
        return w, b

    ks = jax.random.split(key, 5)
    p = {}
    p["fc1_w"], p["fc1_b"] = linear(ks[0], input_dim + condition_dim, hidden_dim)
    p["fc_mu_w"], p["fc_mu_b"] = linear(ks[1], hidden_dim, latent_dim)
    p["fc_logvar_w"], p["fc_logvar_b"] = linear(ks[2], hidden_dim, latent_dim)
    p["fc2_w"], p["fc2_b"] = linear(ks[3], latent_dim + condition_dim, hidden_dim)
    p["fc3_w"], p["fc3_b"] = linear(ks[4], hidden_dim, input_dim)
    return p


def pack_params(p, input_dim, condition_dim, hidden_dim, latent_dim):
    """Pad / pack weights into lane-dense bf16 blocks (done once, outside the kernel)."""
    Din, C, H, L = input_dim, condition_dim, hidden_dim, latent_dim
    Hp = _round_up(H, LANE)
    P = 2 * L + C                    # lane offset of the x|c copy inside the input slab
    assert P + Din + C <= LANE, "input slab layout needs 2L + 2C + Din <= 128"
    assert 2 * L + Din <= LANE, "output slab layout needs 2L + Din <= 128"

    f32, bf16 = jnp.float32, jnp.bfloat16

    # fc1: rows only under the x|c lanes of the packed input slab
    w1 = jnp.zeros((LANE, Hp), f32).at[P:P + Din + C, :H].set(p["fc1_w"]).astype(bf16)
    b1 = jnp.zeros((1, Hp), f32).at[0, :H].set(p["fc1_b"])

    # fused mu|logvar projection; columns >= 2L stay exactly zero (required for zc trick)
    wml = (jnp.zeros((Hp, LANE), f32)
           .at[:H, :L].set(p["fc_mu_w"])
           .at[:H, L:2 * L].set(p["fc_logvar_w"])).astype(bf16)
    bml = (jnp.zeros((1, LANE), f32)
           .at[0, :L].set(p["fc_mu_b"])
           .at[0, L:2 * L].set(p["fc_logvar_b"]))

    # fc2: z-part rows duplicated at [0:L) and [L:2L) (aligns with mu and eps*std lanes),
    #      c-part rows at [2L:2L+C); all other rows zero (kills leftover x|c lanes of zc)
    w2z, w2c = p["fc2_w"][:L], p["fc2_w"][L:L + C]
    w2 = (jnp.zeros((LANE, Hp), f32)
          .at[:L, :H].set(w2z)
          .at[L:2 * L, :H].set(w2z)
          .at[2 * L:2 * L + C, :H].set(w2c)).astype(bf16)
    b2 = jnp.zeros((1, Hp), f32).at[0, :H].set(p["fc2_b"])

    # fc3: output columns shifted to lanes [2L:2L+Din) so mu|logvar|xrec fuse by add
    w3 = jnp.zeros((Hp, LANE), f32).at[:H, 2 * L:2 * L + Din].set(p["fc3_w"]).astype(bf16)
    b3 = jnp.zeros((1, LANE), f32).at[0, 2 * L:2 * L + Din].set(p["fc3_b"])

    return dict(w1=w1, b1=b1, wml=wml, bml=bml, w2=w2, b2=b2, w3=w3, b3=b3)


# --------------------------------------------------------------------------- wrapper
@jax.jit
def vae_forward(x, c, eps, packed):
    """SyntheticVAE.forward: x (B, Din), c (B, C), eps (B, L) -> (x_recon, mu, logvar)."""
    B, Din = x.shape
    C = c.shape[1]
    L = eps.shape[1]
    Hp = packed["w1"].shape[1]

    f32, bf16 = jnp.float32, jnp.bfloat16

    # ---- batch tiling: big tiles amortize pipeline overhead; B > 128 always yields
    #      >= 2 tiles so both v7x TensorCores get work ("parallel" axis).  No BN -> exact.
    B16 = _round_up(max(B, 1), 16)
    if B16 <= 128:
        Bt = B16                                  # single small tile
    else:
        Bt = min(1024, _round_up((B16 + 1) // 2, 16))
    Bp = _round_up(B, Bt)

    # ---- single packed bf16 input slab (one concat + one pad; no repeated zero/set)
    #      lanes: [0:L)=0 | [L:2L)=eps | [2L:2L+C)=c | [2L+C:2L+C+Din)=x | [..+C)=c
    W = 2 * L + 2 * C + Din
    slab = jnp.concatenate(
        [jnp.zeros((B, L), bf16), eps.astype(bf16), c.astype(bf16),
         x.astype(bf16), c.astype(bf16)], axis=1)
    slab = jnp.pad(slab, ((0, Bp - B), (0, LANE - W)))

    row = lambda i: (i, 0)      # batch-tiled operands
    rep = lambda i: (0, 0)      # resident weights / biases

    out = pl.pallas_call(
        functools.partial(_vae_kernel, L),
        out_shape=jax.ShapeDtypeStruct((Bp, LANE), f32),
        grid=(Bp // Bt,),
        in_specs=[
            pl.BlockSpec((Bt, LANE), row),                               # packed input slab
            pl.BlockSpec((LANE, Hp), rep), pl.BlockSpec((1, Hp), rep),   # fc1
            pl.BlockSpec((Hp, LANE), rep), pl.BlockSpec((1, LANE), rep),  # fused fc_mu|fc_logvar
            pl.BlockSpec((LANE, Hp), rep), pl.BlockSpec((1, Hp), rep),   # fc2 (packed)
            pl.BlockSpec((Hp, LANE), rep), pl.BlockSpec((1, LANE), rep),  # fc3 (col-shifted)
        ],
        out_specs=pl.BlockSpec((Bt, LANE), row),
        compiler_params=pltpu.CompilerParams(
            dimension_semantics=("parallel",),        # shard batch tiles across TCs (v7x)
            vmem_limit_bytes=32 * 1024 * 1024),
    )(slab,
      packed["w1"], packed["b1"], packed["wml"], packed["bml"],
      packed["w2"], packed["b2"], packed["w3"], packed["b3"])

    mu = out[:B, :L]
    logvar = out[:B, L:2 * L]
    x_recon = out[:B, 2 * L:2 * L + Din]
    return x_recon, mu, logvar


# --------------------------------------------------------------------------- references
def vae_reference_f32(x, c, eps, p):
    """Pure-f32 JAX mirror of SyntheticVAE.forward (module semantics)."""
    xc = jnp.concatenate([x, c], axis=1)
    h = jnp.maximum(xc @ p["fc1_w"] + p["fc1_b"], 0.0)
    mu = h @ p["fc_mu_w"] + p["fc_mu_b"]
    logvar = h @ p["fc_logvar_w"] + p["fc_logvar_b"]
    z = mu + eps * jnp.exp(0.5 * logvar)
    zc = jnp.concatenate([z, c], axis=1)
    d = jnp.maximum(zc @ p["fc2_w"] + p["fc2_b"], 0.0)
    x_recon = d @ p["fc3_w"] + p["fc3_b"]
    return x_recon, mu, logvar


def vae_reference_bf16(x, c, eps, packed, input_dim, condition_dim, latent_dim):
    """jnp mirror of the kernel's packed bf16 math (tight kernel-correctness check)."""
    f32, bf16 = jnp.float32, jnp.bfloat16
    B = x.shape[0]
    Din, C, L = input_dim, condition_dim, latent_dim

    W = 2 * L + 2 * C + Din
    slab = jnp.concatenate(
        [jnp.zeros((B, L), bf16), eps.astype(bf16), c.astype(bf16),
         x.astype(bf16), c.astype(bf16)], axis=1)
    slab = jnp.pad(slab, ((0, 0), (0, LANE - W)))

    h = jnp.maximum(jnp.dot(slab, packed["w1"],
                            preferred_element_type=f32) + packed["b1"], 0.0)
    mulv = jnp.dot(h.astype(bf16), packed["wml"], preferred_element_type=f32) + packed["bml"]
    lane = jnp.arange(LANE)[None, :]
    zc = jnp.where(lane < L, mulv, 0.0) + slab.astype(f32) * jnp.exp(0.5 * mulv)
    d = jnp.maximum(jnp.dot(zc.astype(bf16), packed["w2"],
                            preferred_element_type=f32) + packed["b2"], 0.0)
    out = mulv + jnp.dot(d.astype(bf16), packed["w3"], preferred_element_type=f32) + packed["b3"]
    return out[:, 2 * L:2 * L + Din], out[:, :L], out[:, L:2 * L]


# --------------------------------------------------------------------------- main
if __name__ == "__main__":
    batch = 8
    input_dim, condition_dim, hidden_dim, latent_dim = 2, 1, 64, 2   # module defaults

    key = jax.random.PRNGKey(0)
    kx, kc, ke, kp = jax.random.split(key, 4)
    x = jax.random.normal(kx, (batch, input_dim), jnp.float32)
    c = jax.random.bernoulli(kc, 0.5, (batch, condition_dim)).astype(jnp.float32)
    # torch.randn_like(std) inside reparameterize -> deterministic eps passed explicitly
    eps = jax.random.normal(ke, (batch, latent_dim), jnp.float32)

    params = init_params(kp, input_dim, condition_dim, hidden_dim, latent_dim)
    packed = pack_params(params, input_dim, condition_dim, hidden_dim, latent_dim)

    x_recon, mu, logvar = vae_forward(x, c, eps, packed)
    jax.block_until_ready((x_recon, mu, logvar))

    # (1) tight check: kernel == jnp mirror of the same packed bf16 computation
    xr_b, mu_b, lv_b = vae_reference_bf16(x, c, eps, packed,
                                          input_dim, condition_dim, latent_dim)
    assert jnp.allclose(x_recon, xr_b, atol=1e-3, rtol=1e-3)
    assert jnp.allclose(mu, mu_b, atol=1e-3, rtol=1e-3)
    assert jnp.allclose(logvar, lv_b, atol=1e-3, rtol=1e-3)

    # (2) semantic check vs the pure-f32 module reference (bf16-matmul tolerance)
    xr_f, mu_f, lv_f = vae_reference_f32(x, c, eps, params)
    assert jnp.allclose(x_recon, xr_f, atol=5e-2, rtol=5e-2)
    assert jnp.allclose(mu, mu_f, atol=5e-2, rtol=5e-2)
    assert jnp.allclose(logvar, lv_f, atol=5e-2, rtol=5e-2)

    assert x_recon.shape == (batch, input_dim)
    assert mu.shape == (batch, latent_dim) and logvar.shape == (batch, latent_dim)

    print("KERNEL_OK")
</pallas_src>

<mosaic_0001>
module attributes {stable_mosaic.version = 11 : i64} {
  func.func @_vae_kernel(%arg0: i32, %arg1: memref<16x128xbf16, #tpu.memory_space<vmem>>, %arg2: memref<128x128xbf16, #tpu.memory_space<vmem>>, %arg3: memref<1x128xf32, #tpu.memory_space<vmem>>, %arg4: memref<128x128xbf16, #tpu.memory_space<vmem>>, %arg5: memref<1x128xf32, #tpu.memory_space<vmem>>, %arg6: memref<128x128xbf16, #tpu.memory_space<vmem>>, %arg7: memref<1x128xf32, #tpu.memory_space<vmem>>, %arg8: memref<128x128xbf16, #tpu.memory_space<vmem>>, %arg9: memref<1x128xf32, #tpu.memory_space<vmem>>, %arg10: memref<16x128xf32, #tpu.memory_space<vmem>>) attributes {dimension_semantics = [#tpu.dimension_semantics<parallel>], iteration_bounds = array<i64: 1>, scalar_prefetch = 0 : i64, scratch_operands = 0 : i64, tpu.core_type = #tpu.core_type<tc>, window_params = [{transform_indices = @transform_0, window_bounds = array<i64: 16, 128>}, {pipeline_mode = #tpu.pipeline_mode<synchronous>, transform_indices = @transform_1, window_bounds = array<i64: 128, 128>}, {pipeline_mode = #tpu.pipeline_mode<synchronous>, transform_indices = @transform_2, window_bounds = array<i64: 1, 128>}, {pipeline_mode = #tpu.pipeline_mode<synchronous>, transform_indices = @transform_3, window_bounds = array<i64: 128, 128>}, {pipeline_mode = #tpu.pipeline_mode<synchronous>, transform_indices = @transform_4, window_bounds = array<i64: 1, 128>}, {pipeline_mode = #tpu.pipeline_mode<synchronous>, transform_indices = @transform_5, window_bounds = array<i64: 128, 128>}, {pipeline_mode = #tpu.pipeline_mode<synchronous>, transform_indices = @transform_6, window_bounds = array<i64: 1, 128>}, {pipeline_mode = #tpu.pipeline_mode<synchronous>, transform_indices = @transform_7, window_bounds = array<i64: 128, 128>}, {pipeline_mode = #tpu.pipeline_mode<synchronous>, transform_indices = @transform_8, window_bounds = array<i64: 1, 128>}, {transform_indices = @transform_9, window_bounds = array<i64: 16, 128>}]} {
    %c0 = arith.constant 0 : index
    %c0_0 = arith.constant 0 : index
    %0 = vector.load %arg1[%c0, %c0_0] : memref<16x128xbf16, #tpu.memory_space<vmem>>, vector<16x128xbf16>
    %1 = arith.extf %0 : vector<16x128xbf16> to vector<16x128xf32>
    %c0_1 = arith.constant 0 : index
    %c0_2 = arith.constant 0 : index
    %2 = vector.load %arg2[%c0_1, %c0_2] : memref<128x128xbf16, #tpu.memory_space<vmem>>, vector<128x128xbf16>
    %cst = arith.constant dense<0.000000e+00> : vector<16x128xf32>
    %3 = tpu.matmul %0, %2, %cst {dimension_numbers = #tpu.dot_dimension_numbers<[1], [0], [0], [1], [0, 0, 1, 1], [], []>} : vector<16x128xbf16>, vector<128x128xbf16>, vector<16x128xf32> -> vector<16x128xf32>
    %c0_3 = arith.constant 0 : index
    %c0_4 = arith.constant 0 : index
    %4 = vector.load %arg3[%c0_3, %c0_4] : memref<1x128xf32, #tpu.memory_space<vmem>>, vector<1x128xf32>
    %5 = vector.broadcast %4 : vector<1x128xf32> to vector<16x128xf32>
    %6 = arith.addf %3, %5 : vector<16x128xf32>
    %cst_5 = arith.constant 0.000000e+00 : f32
    %7 = vector.broadcast %cst_5 : f32 to vector<16x128xf32>
    %8 = arith.maximumf %6, %7 : vector<16x128xf32>
    %9 = arith.truncf %8 : vector<16x128xf32> to vector<16x128xbf16>
    %c0_6 = arith.constant 0 : index
    %c0_7 = arith.constant 0 : index
    %10 = vector.load %arg4[%c0_6, %c0_7] : memref<128x128xbf16, #tpu.memory_space<vmem>>, vector<128x128xbf16>
    %cst_8 = arith.constant dense<0.000000e+00> : vector<16x128xf32>
    %11 = tpu.matmul %9, %10, %cst_8 {dimension_numbers = #tpu.dot_dimension_numbers<[1], [0], [0], [1], [0, 0, 1, 1], [], []>} : vector<16x128xbf16>, vector<128x128xbf16>, vector<16x128xf32> -> vector<16x128xf32>
    %c0_9 = arith.constant 0 : index
    %c0_10 = arith.constant 0 : index
    %12 = vector.load %arg5[%c0_9, %c0_10] : memref<1x128xf32, #tpu.memory_space<vmem>>, vector<1x128xf32>
    %13 = vector.broadcast %12 : vector<1x128xf32> to vector<16x128xf32>
    %14 = arith.addf %11, %13 : vector<16x128xf32>
    %15 = tpu.iota {dimensions = array<i32: 1>} : vector<16x128xi32>
    %c2_i32 = arith.constant 2 : i32
    %16 = vector.broadcast %c2_i32 : i32 to vector<16x128xi32>
    %17 = arith.cmpi slt, %15, %16 : vector<16x128xi32>
    %cst_11 = arith.constant 0.000000e+00 : f32
    %18 = vector.broadcast %cst_11 : f32 to vector<16x128xf32>
    %19 = arith.select %17, %14, %18 : vector<16x128xi1>, vector<16x128xf32>
    %cst_12 = arith.constant 5.000000e-01 : f32
    %20 = vector.broadcast %cst_12 : f32 to vector<16x128xf32>
    %21 = arith.mulf %20, %14 : vector<16x128xf32>
    %22 = math.exp %21 : vector<16x128xf32>
    %23 = arith.mulf %1, %22 : vector<16x128xf32>
    %24 = arith.addf %19, %23 : vector<16x128xf32>
    %25 = arith.truncf %24 : vector<16x128xf32> to vector<16x128xbf16>
    %c0_13 = arith.constant 0 : index
    %c0_14 = arith.constant 0 : index
    %26 = vector.load %arg6[%c0_13, %c0_14] : memref<128x128xbf16, #tpu.memory_space<vmem>>, vector<128x128xbf16>
    %cst_15 = arith.constant dense<0.000000e+00> : vector<16x128xf32>
    %27 = tpu.matmul %25, %26, %cst_15 {dimension_numbers = #tpu.dot_dimension_numbers<[1], [0], [0], [1], [0, 0, 1, 1], [], []>} : vector<16x128xbf16>, vector<128x128xbf16>, vector<16x128xf32> -> vector<16x128xf32>
    %c0_16 = arith.constant 0 : index
    %c0_17 = arith.constant 0 : index
    %28 = vector.load %arg7[%c0_16, %c0_17] : memref<1x128xf32, #tpu.memory_space<vmem>>, vector<1x128xf32>
    %29 = vector.broadcast %28 : vector<1x128xf32> to vector<16x128xf32>
    %30 = arith.addf %27, %29 : vector<16x128xf32>
    %cst_18 = arith.constant 0.000000e+00 : f32
    %31 = vector.broadcast %cst_18 : f32 to vector<16x128xf32>
    %32 = arith.maximumf %30, %31 : vector<16x128xf32>
    %33 = arith.truncf %32 : vector<16x128xf32> to vector<16x128xbf16>
    %c0_19 = arith.constant 0 : index
    %c0_20 = arith.constant 0 : index
    %34 = vector.load %arg8[%c0_19, %c0_20] : memref<128x128xbf16, #tpu.memory_space<vmem>>, vector<128x128xbf16>
    %cst_21 = arith.constant dense<0.000000e+00> : vector<16x128xf32>
    %35 = tpu.matmul %33, %34, %cst_21 {dimension_numbers = #tpu.dot_dimension_numbers<[1], [0], [0], [1], [0, 0, 1, 1], [], []>} : vector<16x128xbf16>, vector<128x128xbf16>, vector<16x128xf32> -> vector<16x128xf32>
    %c0_22 = arith.constant 0 : index
    %c0_23 = arith.constant 0 : index
    %36 = vector.load %arg9[%c0_22, %c0_23] : memref<1x128xf32, #tpu.memory_space<vmem>>, vector<1x128xf32>
    %37 = vector.broadcast %36 : vector<1x128xf32> to vector<16x128xf32>
    %38 = arith.addf %35, %37 : vector<16x128xf32>
    %39 = arith.addf %14, %38 : vector<16x128xf32>
    %c0_24 = arith.constant 0 : index
    %c0_25 = arith.constant 0 : index
    %40 = vector.load %arg10[%c0_24, %c0_25] : memref<16x128xf32, #tpu.memory_space<vmem>>, vector<16x128xf32>
    tpu.vector_store %arg10[%c0_24, %c0_25], %39 {strides = array<i32>} : memref<16x128xf32, #tpu.memory_space<vmem>>, vector<16x128xf32>,
    return
  }
  func.func @transform_0(%arg0: i32) -> (i32, i32) {
    %c0_i32 = arith.constant 0 : i32
    %c0_i32_0 = arith.constant 0 : i32
    return %arg0, %c0_i32 : i32, i32
  }
  func.func @transform_1(%arg0: i32) -> (i32, i32) {
    %c0_i32 = arith.constant 0 : i32
    %c0_i32_0 = arith.constant 0 : i32
    %c0_i32_1 = arith.constant 0 : i32
    return %c0_i32, %c0_i32_0 : i32, i32
  }
  func.func @transform_2(%arg0: i32) -> (i32, i32) {
    %c0_i32 = arith.constant 0 : i32
    %c0_i32_0 = arith.constant 0 : i32
    %c0_i32_1 = arith.constant 0 : i32
    return %c0_i32, %c0_i32_0 : i32, i32
  }
  func.func @transform_3(%arg0: i32) -> (i32, i32) {
    %c0_i32 = arith.constant 0 : i32
    %c0_i32_0 = arith.constant 0 : i32
    %c0_i32_1 = arith.constant 0 : i32
    return %c0_i32, %c0_i32_0 : i32, i32
  }
  func.func @transform_4(%arg0: i32) -> (i32, i32) {
    %c0_i32 = arith.constant 0 : i32
    %c0_i32_0 = arith.constant 0 : i32
    %c0_i32_1 = arith.constant 0 : i32
    return %c0_i32, %c0_i32_0 : i32, i32
  }
  func.func @transform_5(%arg0: i32) -> (i32, i32) {
    %c0_i32 = arith.constant 0 : i32
    %c0_i32_0 = arith.constant 0 : i32
    %c0_i32_1 = arith.constant 0 : i32
    return %c0_i32, %c0_i32_0 : i32, i32
  }
  func.func @transform_6(%arg0: i32) -> (i32, i32) {
    %c0_i32 = arith.constant 0 : i32
    %c0_i32_0 = arith.constant 0 : i32
    %c0_i32_1 = arith.constant 0 : i32
    return %c0_i32, %c0_i32_0 : i32, i32
  }
  func.func @transform_7(%arg0: i32) -> (i32, i32) {
    %c0_i32 = arith.constant 0 : i32
    %c0_i32_0 = arith.constant 0 : i32
    %c0_i32_1 = arith.constant 0 : i32
    return %c0_i32, %c0_i32_0 : i32, i32
  }
  func.func @transform_8(%arg0: i32) -> (i32, i32) {
    %c0_i32 = arith.constant 0 : i32
    %c0_i32_0 = arith.constant 0 : i32
    %c0_i32_1 = arith.constant 0 : i32
    return %c0_i32, %c0_i32_0 : i32, i32
  }
  func.func @transform_9(%arg0: i32) -> (i32, i32) {
    %c0_i32 = arith.constant 0 : i32
    %c0_i32_0 = arith.constant 0 : i32
    return %arg0, %c0_i32 : i32, i32
  }
}

</mosaic_0001>

<llo_original>
// kernel: vae_forward.1
$region0: #{vae_forward.1}
  #allocation0 [shape = 'u32[]', space=smem, size = 0x4, offset = 0x4, fixed_abs, tag = 'smem constant byte address 0x4 - core index']
  #allocation1 [shape = 'u32[72,128]{1,0:T(1,128)}', space=vmem, size = 0x9000, scoped, tag = 'internal scratch']
  %s0 = inlined_call_operand.vmem [shape: bf16[16,128], index: 0, kind: input, shape index: {}]
  %s1 = inlined_call_operand.hbm [shape: bf16[128,128], index: 1, kind: input, shape index: {}]
  %s2 = inlined_call_operand.vmem [shape: f32[1,128], index: 2, kind: input, shape index: {}]
  %s3 = inlined_call_operand.hbm [shape: bf16[128,128], index: 3, kind: input, shape index: {}]
  %s4 = inlined_call_operand.vmem [shape: f32[1,128], index: 4, kind: input, shape index: {}]
  %s5 = inlined_call_operand.hbm [shape: bf16[128,128], index: 5, kind: input, shape index: {}]
  %s6 = inlined_call_operand.vmem [shape: f32[1,128], index: 6, kind: input, shape index: {}]
  %s7 = inlined_call_operand.hbm [shape: bf16[128,128], index: 7, kind: input, shape index: {}]
  %s8 = inlined_call_operand.vmem [shape: f32[1,128], index: 8, kind: input, shape index: {}]
  %s9 = inlined_call_operand.vmem [shape: f32[16,128], index: 9, kind: output, shape index: {}]
  %s10 = sld [smem:[#allocation0]]
  $region62: #{vae_forward.1} parent=0
    _
  %s12 = ssub.s32 1, %s10
  %s13 = scalar_select 0, %s12, %s10
  $region1: #{vae_forward.1} parent=0
    #allocation2 [shape = 'u8[32768]{0}', space=vmem, size = 0x8000, scoped, tag = 'input window, operand 1, single buffered']
    #allocation3 [shape = 's32[1]{0}', space=sflag, size = 0x4, scoped, tag = 'scoped memory for vae_forward.1']
    #allocation4 [shape = 'u8[32768]{0}', space=vmem, size = 0x8000, scoped, tag = 'input window, operand 3, single buffered']
    #allocation5 [shape = 's32[1]{0}', space=sflag, size = 0x4, scoped, tag = 'scoped memory for vae_forward.1']
    #allocation6 [shape = 'u8[32768]{0}', space=vmem, size = 0x8000, scoped, tag = 'input window, operand 5, single buffered']
    #allocation7 [shape = 'u8[32768]{0}', space=vmem, size = 0x8000, scoped, tag = 'input window, operand 7, single buffered']
    #allocation8 [shape = 's32[1]{0}', space=sflag, size = 0x4, scoped, tag = 'scoped memory for vae_forward.1']
    %14 = vsyncpa [#allocation3], 0
    %15 = vsyncpa [#allocation5], 0
    %16 = vsyncpa [#allocation8], 0
    // Predicated region
    $region2: #{vae_forward.1} parent=1 // pred_check
      _
    $region3: #{vae_forward.1} parent=1 // pred_check_branch
      %18 = sbr.rel (0) target = $region5
    $region4: #{vae_forward.1} parent=1 // pred_region
      _
    $region5: #{vae_forward.1} parent=1 // pred_fallthru
      _
    // Predicated region
    $region6: #{vae_forward.1} parent=1 // pred_check
      _
    $region7: #{vae_forward.1} parent=1 // pred_check_branch
      %20 = sbr.rel (0) target = $region9
    $region8: #{vae_forward.1} parent=1 // pred_region
      %22 = vsyncadd [#allocation3], 0
      %s23 = sshll.u32 %s1, 4
      %s24 = int_to_ptr.hbm [resolvable:$true] %s23
      %s25 = sshll.u32 [#allocation2], 4
      %s26 = int_to_ptr.vmem [resolvable:$true] %s25
      %31 = dma.hbm_to_vmem [thread:$0]  %s24, 1024, %s26, [#allocation3], 64, 64, 4
    $region9: #{vae_forward.1} parent=1 // pred_fallthru
      _
    // Predicated region
    $region10: #{vae_forward.1} parent=1 // pred_check
      _
    $region11: #{vae_forward.1} parent=1 // pred_check_branch
      %33 = sbr.rel (0) target = $region13
    $region12: #{vae_forward.1} parent=1 // pred_region
      _
    $region13: #{vae_forward.1} parent=1 // pred_fallthru
      _
    // Predicated region
    $region14: #{vae_forward.1} parent=1 // pred_check
      _
    $region15: #{vae_forward.1} parent=1 // pred_check_branch
      %35 = sbr.rel (0) target = $region17
    $region16: #{vae_forward.1} parent=1 // pred_region
      %37 = vsyncadd [#allocation5], 0
      %s38 = sshll.u32 %s3, 4
      %s39 = int_to_ptr.hbm [resolvable:$true] %s38
      %s40 = sshll.u32 [#allocation4], 4
      %s41 = int_to_ptr.vmem [resolvable:$true] %s40
      %46 = dma.hbm_to_vmem [thread:$0]  %s39, 1024, %s41, [#allocation5], 64, 64, 4
    $region17: #{vae_forward.1} parent=1 // pred_fallthru
      _
    // Predicated region
    $region18: #{vae_forward.1} parent=1 // pred_check
      _
    $region19: #{vae_forward.1} parent=1 // pred_check_branch
      %48 = sbr.rel (0) target = $region21
    $region20: #{vae_forward.1} parent=1 // pred_region
      _
    $region21: #{vae_forward.1} parent=1 // pred_fallthru
      _
    // Predicated region
    $region22: #{vae_forward.1} parent=1 // pred_check
      _
    $region23: #{vae_forward.1} parent=1 // pred_check_branch
      %50 = sbr.rel (0) target = $region25
    $region24: #{vae_forward.1} parent=1 // pred_region
      %52 = vsyncadd [#allocation5], 0
      %s53 = sshll.u32 %s5, 4
      %s54 = int_to_ptr.hbm [resolvable:$true] %s53
      %s55 = sshll.u32 [#allocation6], 4
      %s56 = int_to_ptr.vmem [resolvable:$true] %s55
      %61 = dma.hbm_to_vmem [thread:$0]  %s54, 1024, %s56, [#allocation5], 64, 64, 4
    $region25: #{vae_forward.1} parent=1 // pred_fallthru
      _
    // Predicated region
    $region26: #{vae_forward.1} parent=1 // pred_check
      _
    $region27: #{vae_forward.1} parent=1 // pred_check_branch
      %63 = sbr.rel (0) target = $region29
    $region28: #{vae_forward.1} parent=1 // pred_region
      _
    $region29: #{vae_forward.1} parent=1 // pred_fallthru
      _
    // Predicated region
    $region30: #{vae_forward.1} parent=1 // pred_check
      _
    $region31: #{vae_forward.1} parent=1 // pred_check_branch
      %65 = sbr.rel (0) target = $region33
    $region32: #{vae_forward.1} parent=1 // pred_region
      %67 = vsyncadd [#allocation8], 0
      %s68 = sshll.u32 %s7, 4
      %s69 = int_to_ptr.hbm [resolvable:$true] %s68
      %s70 = sshll.u32 [#allocation7], 4
      %s71 = int_to_ptr.vmem [resolvable:$true] %s70
      %76 = dma.hbm_to_vmem [thread:$0]  %s69, 1024, %s71, [#allocation8], 64, 64, 4
    $region33: #{vae_forward.1} parent=1 // pred_fallthru
      _
    // Predicated region
    $region34: #{vae_forward.1} parent=1 // pred_check
      _
    $region35: #{vae_forward.1} parent=1 // pred_check_branch
      %78 = sbr.rel (0) target = $region37
    $region36: #{vae_forward.1} parent=1 // pred_region
      _
    $region37: #{vae_forward.1} parent=1 // pred_fallthru
      _
    // Predicated region
    $region38: #{vae_forward.1} parent=1 // pred_check
      _
    $region39: #{vae_forward.1} parent=1 // pred_check_branch
      %80 = sbr.rel (0) target = $region41
    $region40: #{vae_forward.1} parent=1 // pred_region
      %82 = dma.done [#allocation3], 1024
    $region41: #{vae_forward.1} parent=1 // pred_fallthru
      _
    // Predicated region
    $region42: #{vae_forward.1} parent=1 // pred_check
      _
    $region43: #{vae_forward.1} parent=1 // pred_check_branch
      %84 = sbr.rel (0) target = $region45
    $region44: #{vae_forward.1} parent=1 // pred_region
      %86 = dma.done [#allocation5], 1024
    $region45: #{vae_forward.1} parent=1 // pred_fallthru
      _
    // Predicated region
    $region46: #{vae_forward.1} parent=1 // pred_check
      _
    $region47: #{vae_forward.1} parent=1 // pred_check_branch
      %88 = sbr.rel (0) target = $region49
    $region48: #{vae_forward.1} parent=1 // pred_region
      %90 = dma.done [#allocation5], 1024
    $region49: #{vae_forward.1} parent=1 // pred_fallthru
      _
    // Predicated region
    $region50: #{vae_forward.1} parent=1 // pred_check
      _
    $region51: #{vae_forward.1} parent=1 // pred_check_branch
      %92 = sbr.rel (0) target = $region53
    $region52: #{vae_forward.1} parent=1 // pred_region
      %94 = dma.done [#allocation8], 1024
    $region53: #{vae_forward.1} parent=1 // pred_fallthru
      _
    %v95 = vld [vmem:[%s0] sm:$0xf]
    %v96 = vld [vmem:[%s0 + $0x4] sm:$0xf]
    %v97 = vunpack.c.l.bf16 %v95
    %v98 = vunpack.c.l.bf16 %v96
    %v99 = vld [vmem:[#allocation2] sm:$0xf]
    %v100 = vld [vmem:[#allocation2 + $0x4] sm:$0xf]
    %v101 = vld [vmem:[#allocation2 + $0x8] sm:$0xf]
    %v102 = vld [vmem:[#allocation2 + $0xc] sm:$0xf]
    %v103 = vld [vmem:[#allocation2 + $0x10] sm:$0xf]
    %v104 = vld [vmem:[#allocation2 + $0x14] sm:$0xf]
    %v105 = vld [vmem:[#allocation2 + $0x18] sm:$0xf]
    %v106 = vld [vmem:[#allocation2 + $0x1c] sm:$0xf]
    %v107 = vld [vmem:[#allocation2 + $0x20] sm:$0xf]
    %v108 = vld [vmem:[#allocation2 + $0x24] sm:$0xf]
    %v109 = vld [vmem:[#allocation2 + $0x28] sm:$0xf]
    %v110 = vld [vmem:[#allocation2 + $0x2c] sm:$0xf]
    %v111 = vld [vmem:[#allocation2 + $0x30] sm:$0xf]
    %v112 = vld [vmem:[#allocation2 + $0x34] sm:$0xf]
    %v113 = vld [vmem:[#allocation2 + $0x38] sm:$0xf]
    %v114 = vld [vmem:[#allocation2 + $0x3c] sm:$0xf]
    %v115 = vld [vmem:[%s2] sm:$0x1]
    %v117 = vperm.slane %v115, 0
    %v121 = vunpack.c.l.b16 %v95
    %v122 = vunpack.c.l.b16 %v96
    %v123 = vpack.c.b16 %v122, %v121
    %v141 = vunpack.c.l.b16 %v99
    %v142 = vunpack.c.l.b16 %v100
    %v143 = vunpack.c.l.b16 %v101
    %v144 = vunpack.c.l.b16 %v102
    %v145 = vunpack.c.l.b16 %v103
    %v146 = vunpack.c.l.b16 %v104
    %v147 = vunpack.c.l.b16 %v105
    %v148 = vunpack.c.l.b16 %v106
    %v149 = vunpack.c.l.b16 %v107
    %v150 = vunpack.c.l.b16 %v108
    %v151 = vunpack.c.l.b16 %v109
    %v152 = vunpack.c.l.b16 %v110
    %v153 = vunpack.c.l.b16 %v111
    %v154 = vunpack.c.l.b16 %v112
    %v155 = vunpack.c.l.b16 %v113
    %v156 = vunpack.c.l.b16 %v114
    %v157 = vpack.c.b16 %v142, %v141
    %v158 = vpack.c.b16 %v144, %v143
    %v159 = vpack.c.b16 %v146, %v145
    %v160 = vpack.c.b16 %v148, %v147
    %v161 = vpack.c.b16 %v150, %v149
    %v162 = vpack.c.b16 %v152, %v151
    %v163 = vpack.c.b16 %v154, %v153
    %v164 = vpack.c.b16 %v156, %v155
    %173 = vmatpush.bf16.msra.mxu0 %v164
    %174 = vmatpush.bf16.msra.mxu0 %v163
    %175 = vmatpush.bf16.msra.mxu0 %v162
    %176 = vmatpush.bf16.msra.mxu0 %v161
    %177 = vmatpush.bf16.msra.mxu0 %v160
    %178 = vmatpush.bf16.msra.mxu0 %v159
    %179 = vmatpush.bf16.msra.mxu0 %v158
    %180 = vmatpush.bf16.msra.mxu0 %v157
    %181 = vmatmul.bf16.gmra.mxu0 %v123
    %v182 = vpop.f32.mrf.mxu0
    %v183 = vadd.f32 %v117, %v182
    %v184 = vpop.f32.mrf.mxu0
    %v185 = vadd.f32 %v117, %v184
    %186 = vdwg.mxu0
    %v187 = vmax.f32 %v183, 0.0
    %v188 = vmax.f32 %v185, 0.0
    %v189 = vpack.c.bf16 %v188, %v187
    %v190 = vld [vmem:[#allocation4] sm:$0xf]
    %v191 = vld [vmem:[#allocation4 + $0x4] sm:$0xf]
    %v192 = vld [vmem:[#allocation4 + $0x8] sm:$0xf]
    %v193 = vld [vmem:[#allocation4 + $0xc] sm:$0xf]
    %v194 = vld [vmem:[#allocation4 + $0x10] sm:$0xf]
    %v195 = vld [vmem:[#allocation4 + $0x14] sm:$0xf]
    %v196 = vld [vmem:[#allocation4 + $0x18] sm:$0xf]
    %v197 = vld [vmem:[#allocation4 + $0x1c] sm:$0xf]
    %v198 = vld [vmem:[#allocation4 + $0x20] sm:$0xf]
    %v199 = vld [vmem:[#allocation4 + $0x24] sm:$0xf]
    %v200 = vld [vmem:[#allocation4 + $0x28] sm:$0xf]
    %v201 = vld [vmem:[#allocation4 + $0x2c] sm:$0xf]
    %v202 = vld [vmem:[#allocation4 + $0x30] sm:$0xf]
    %v203 = vld [vmem:[#allocation4 + $0x34] sm:$0xf]
    %v204 = vld [vmem:[#allocation4 + $0x38] sm:$0xf]
    %v205 = vld [vmem:[#allocation4 + $0x3c] sm:$0xf]
    %v206 = vld [vmem:[%s4] sm:$0x1]
    %v208 = vperm.slane %v206, 0
    %v226 = vunpack.c.l.b16 %v190
    %v227 = vunpack.c.l.b16 %v191
    %v228 = vunpack.c.l.b16 %v192
    %v229 = vunpack.c.l.b16 %v193
    %v230 = vunpack.c.l.b16 %v194
    %v231 = vunpack.c.l.b16 %v195
    %v232 = vunpack.c.l.b16 %v196
    %v233 = vunpack.c.l.b16 %v197
    %v234 = vunpack.c.l.b16 %v198
    %v235 = vunpack.c.l.b16 %v199
    %v236 = vunpack.c.l.b16 %v200
    %v237 = vunpack.c.l.b16 %v201
    %v238 = vunpack.c.l.b16 %v202
    %v239 = vunpack.c.l.b16 %v203
    %v240 = vunpack.c.l.b16 %v204
    %v241 = vunpack.c.l.b16 %v205
    %v242 = vpack.c.b16 %v227, %v226
    %v243 = vpack.c.b16 %v229, %v228
    %v244 = vpack.c.b16 %v231, %v230
    %v245 = vpack.c.b16 %v233, %v232
    %v246 = vpack.c.b16 %v235, %v234
    %v247 = vpack.c.b16 %v237, %v236
    %v248 = vpack.c.b16 %v239, %v238
    %v249 = vpack.c.b16 %v241, %v240
    %258 = vmatpush.bf16.msra.mxu0 %v249
    %259 = vmatpush.bf16.msra.mxu0 %v248
    %260 = vmatpush.bf16.msra.mxu0 %v247
    %261 = vmatpush.bf16.msra.mxu0 %v246
    %262 = vmatpush.bf16.msra.mxu0 %v245
    %263 = vmatpush.bf16.msra.mxu0 %v244
    %264 = vmatpush.bf16.msra.mxu0 %v243
    %265 = vmatpush.bf16.msra.mxu0 %v242
    %266 = vmatmul.bf16.gmra.mxu0 %v189
    %v267 = vpop.f32.mrf.mxu0
    %v268 = vadd.f32 %v208, %v267
    %v269 = vpop.f32.mrf.mxu0
    %v270 = vadd.f32 %v208, %v269
    %271 = vdwg.mxu0
    %v272 = vlaneseq
    %v273 = vand.u32 %v272, 127
    %vm274 = vcmp.lt.s32.totalorder %v273, 2
    %v275 = vsel %vm274, %v268, 0.0
    %v276 = vsel %vm274, %v270, 0.0
    %v277 = vmul.f32 %v268, 0.5
    %v278 = vmul.f32 %v270, 0.5
    %v279 = vmul.f32 %v277, 1.442695
    %v280 = vpow.pop %v279
    %v281 = vmul.f32 %v278, 1.442695
    %v282 = vpow.pop %v281
    %v283 = vmul.f32 %v97, %v280
    %v284 = vmul.f32 %v98, %v282
    %v285 = vadd.f32 %v275, %v283
    %v286 = vadd.f32 %v276, %v284
    %v287 = vpack.c.bf16 %v286, %v285
    %v288 = vld [vmem:[#allocation6] sm:$0xf]
    %v289 = vld [vmem:[#allocation6 + $0x4] sm:$0xf]
    %v290 = vld [vmem:[#allocation6 + $0x8] sm:$0xf]
    %v291 = vld [vmem:[#allocation6 + $0xc] sm:$0xf]
    %v292 = vld [vmem:[#allocation6 + $0x10] sm:$0xf]
    %v293 = vld [vmem:[#allocation6 + $0x14] sm:$0xf]
    %v294 = vld [vmem:[#allocation6 + $0x18] sm:$0xf]
    %v295 = vld [vmem:[#allocation6 + $0x1c] sm:$0xf]
    %v296 = vld [vmem:[#allocation6 + $0x20] sm:$0xf]
    %v297 = vld [vmem:[#allocation6 + $0x24] sm:$0xf]
    %v298 = vld [vmem:[#allocation6 + $0x28] sm:$0xf]
    %v299 = vld [vmem:[#allocation6 + $0x2c] sm:$0xf]
    %v300 = vld [vmem:[#allocation6 + $0x30] sm:$0xf]
    %v301 = vld [vmem:[#allocation6 + $0x34] sm:$0xf]
    %v302 = vld [vmem:[#allocation6 + $0x38] sm:$0xf]
    %v303 = vld [vmem:[#allocation6 + $0x3c] sm:$0xf]
    %v304 = vld [vmem:[%s6] sm:$0x1]
    %v306 = vperm.slane %v304, 0
    %v324 = vunpack.c.l.b16 %v288
    %v325 = vunpack.c.l.b16 %v289
    %v326 = vunpack.c.l.b16 %v290
    %v327 = vunpack.c.l.b16 %v291
    %v328 = vunpack.c.l.b16 %v292
    %v329 = vunpack.c.l.b16 %v293
    %v330 = vunpack.c.l.b16 %v294
    %v331 = vunpack.c.l.b16 %v295
    %v332 = vunpack.c.l.b16 %v296
    %v333 = vunpack.c.l.b16 %v297
    %v334 = vunpack.c.l.b16 %v298
    %v335 = vunpack.c.l.b16 %v299
    %v336 = vunpack.c.l.b16 %v300
    %v337 = vunpack.c.l.b16 %v301
    %v338 = vunpack.c.l.b16 %v302
    %v339 = vunpack.c.l.b16 %v303
    %v340 = vpack.c.b16 %v325, %v324
    %v341 = vpack.c.b16 %v327, %v326
    %v342 = vpack.c.b16 %v329, %v328
    %v343 = vpack.c.b16 %v331, %v330
    %v344 = vpack.c.b16 %v333, %v332
    %v345 = vpack.c.b16 %v335, %v334
    %v346 = vpack.c.b16 %v337, %v336
    %v347 = vpack.c.b16 %v339, %v338
    %356 = vmatpush.bf16.msra.mxu0 %v347
    %357 = vmatpush.bf16.msra.mxu0 %v346
    %358 = vmatpush.bf16.msra.mxu0 %v345
    %359 = vmatpush.bf16.msra.mxu0 %v344
    %360 = vmatpush.bf16.msra.mxu0 %v343
    %361 = vmatpush.bf16.msra.mxu0 %v342
    %362 = vmatpush.bf16.msra.mxu0 %v341
    %363 = vmatpush.bf16.msra.mxu0 %v340
    %364 = vmatmul.bf16.gmra.mxu0 %v287
    %v365 = vpop.f32.mrf.mxu0
    %v366 = vadd.f32 %v306, %v365
    %v367 = vpop.f32.mrf.mxu0
    %v368 = vadd.f32 %v306, %v367
    %369 = vdwg.mxu0
    %v370 = vmax.f32 %v366, 0.0
    %v371 = vmax.f32 %v368, 0.0
    %v372 = vpack.c.bf16 %v371, %v370
    %v373 = vld [vmem:[#allocation7] sm:$0xf]
    %v374 = vld [vmem:[#allocation7 + $0x4] sm:$0xf]
    %v375 = vld [vmem:[#allocation7 + $0x8] sm:$0xf]
    %v376 = vld [vmem:[#allocation7 + $0xc] sm:$0xf]
    %v377 = vld [vmem:[#allocation7 + $0x10] sm:$0xf]
    %v378 = vld [vmem:[#allocation7 + $0x14] sm:$0xf]
    %v379 = vld [vmem:[#allocation7 + $0x18] sm:$0xf]
    %v380 = vld [vmem:[#allocation7 + $0x1c] sm:$0xf]
    %v381 = vld [vmem:[#allocation7 + $0x20] sm:$0xf]
    %v382 = vld [vmem:[#allocation7 + $0x24] sm:$0xf]
    %v383 = vld [vmem:[#allocation7 + $0x28] sm:$0xf]
    %v384 = vld [vmem:[#allocation7 + $0x2c] sm:$0xf]
    %v385 = vld [vmem:[#allocation7 + $0x30] sm:$0xf]
    %v386 = vld [vmem:[#allocation7 + $0x34] sm:$0xf]
    %v387 = vld [vmem:[#allocation7 + $0x38] sm:$0xf]
    %v388 = vld [vmem:[#allocation7 + $0x3c] sm:$0xf]
    %v389 = vld [vmem:[%s8] sm:$0x1]
    %v391 = vperm.slane %v389, 0
    %v409 = vunpack.c.l.b16 %v373
    %v410 = vunpack.c.l.b16 %v374
    %v411 = vunpack.c.l.b16 %v375
    %v412 = vunpack.c.l.b16 %v376
    %v413 = vunpack.c.l.b16 %v377
    %v414 = vunpack.c.l.b16 %v378
    %v415 = vunpack.c.l.b16 %v379
    %v416 = vunpack.c.l.b16 %v380
    %v417 = vunpack.c.l.b16 %v381
    %v418 = vunpack.c.l.b16 %v382
    %v419 = vunpack.c.l.b16 %v383
    %v420 = vunpack.c.l.b16 %v384
    %v421 = vunpack.c.l.b16 %v385
    %v422 = vunpack.c.l.b16 %v386
    %v423 = vunpack.c.l.b16 %v387
    %v424 = vunpack.c.l.b16 %v388
    %v425 = vpack.c.b16 %v410, %v409
    %v426 = vpack.c.b16 %v412, %v411
    %v427 = vpack.c.b16 %v414, %v413
    %v428 = vpack.c.b16 %v416, %v415
    %v429 = vpack.c.b16 %v418, %v417
    %v430 = vpack.c.b16 %v420, %v419
    %v431 = vpack.c.b16 %v422, %v421
    %v432 = vpack.c.b16 %v424, %v423
    %441 = vmatpush.bf16.msra.mxu0 %v432
    %442 = vmatpush.bf16.msra.mxu0 %v431
    %443 = vmatpush.bf16.msra.mxu0 %v430
    %444 = vmatpush.bf16.msra.mxu0 %v429
    %445 = vmatpush.bf16.msra.mxu0 %v428
    %446 = vmatpush.bf16.msra.mxu0 %v427
    %447 = vmatpush.bf16.msra.mxu0 %v426
    %448 = vmatpush.bf16.msra.mxu0 %v425
    %449 = vmatmul.bf16.gmra.mxu0 %v372
    %v450 = vpop.f32.mrf.mxu0
    %v451 = vadd.f32 %v391, %v450
    %v452 = vpop.f32.mrf.mxu0
    %v453 = vadd.f32 %v391, %v452
    %454 = vdwg.mxu0
    %v455 = vadd.f32 %v268, %v451
    %v456 = vadd.f32 %v270, %v453
    %457 = vst [vmem:[%s9] sm:$0xff] %v455
    %458 = vst [vmem:[%s9 + $0x8] sm:$0xff] %v456
    // Predicated region
    $region54: #{vae_forward.1} parent=1 // pred_check
      _
    $region55: #{vae_forward.1} parent=1 // pred_check_branch
      %460 = sbr.rel (0) target = $region57
    $region56: #{vae_forward.1} parent=1 // pred_region
      _
    $region57: #{vae_forward.1} parent=1 // pred_fallthru
      _
    // Predicated region
    $region58: #{vae_forward.1} parent=1 // pred_check
      _
    $region59: #{vae_forward.1} parent=1 // pred_check_branch
      %462 = sbr.rel (0) target = $region61
    $region60: #{vae_forward.1} parent=1 // pred_region
      _
    $region61: #{vae_forward.1} parent=1 // pred_fallthru
      _
    %463 = vsyncpa [#allocation3], 1
    %464 = vsyncpa [#allocation5], 1
    %465 = vsyncpa [#allocation8], 1

</llo_original>
